<compile_context>
chip_gen: v7x
topology: tpu7x:2x2x1
jax: 0.10.0
libtpu: 0.0.40
codegen_flags: <defaults>
</compile_context>

<pallas_src>
import functools

import jax
import jax.numpy as jnp
from jax import lax
from jax.experimental import pallas as pl
from jax.experimental.pallas import tpu as pltpu


def _round_up(x, m):
    return ((x + m - 1) // m) * m


def _safe_recip(x):
    """Zero-guarded reciprocal: EUP approx + one Newton step (f32-accurate)."""
    x = jnp.where(x == 0.0, jnp.float32(1.0), x)
    r = pl.reciprocal(x, approx=True)
    return r * (2.0 - x * r)


def _vmem_capacity_bytes():
    """Physical per-core VMEM (128 MiB v5e/v6e, 64 MiB v7x); conservative fallback."""
    try:
        cap = getattr(pltpu.get_tpu_info(), "vmem_capacity_bytes", None)
        if cap:
            return int(cap)
    except Exception:
        pass
    return 64 << 20  # conservative: v7x per-TensorCore VMEM


def _sp_matching_kernel(ref_ref, srcT_ref, rmask_ref, smask_ref,        # inputs
                        score_out, ridx_out, cidx_out,                  # SMEM outputs
                        s_scr, rowsum_scr, colsum_scr, rowmax_scr,      # VMEM scratch
                        *, tile_n, k, dual_normalization):
    i = pl.program_id(0)
    n_tiles = pl.num_programs(0)
    n_pad, m_pad = s_scr.shape

    @pl.when(i == 0)
    def _init():
        colsum_scr[...] = jnp.zeros_like(colsum_scr)

    # ---- pipelined main body: canonical (tile_n, C) @ (C, M) on the MXU ---------
    # pairwise_distance(..., normalized=True): d = clamp(2 - 2 * ref @ src^T, 0)
    xy = lax.dot_general(ref_ref[...], srcT_ref[...],
                         dimension_numbers=(((1,), (0,)), ((), ())),
                         preferred_element_type=jnp.float32)             # (tile_n, m_pad)
    d = jnp.maximum(2.0 - 2.0 * xy, 0.0)
    # masked / padded rows and columns are zeroed (equivalent to gathering valid pts)
    s = jnp.exp(-d) * rmask_ref[...] * smask_ref[...]                    # (tile_n, m_pad)
    row0 = pl.multiple_of(i * tile_n, tile_n)
    s_scr[pl.ds(row0, tile_n), :] = s
    # row / column sums computed incrementally here (hidden under the pipeline)
    rowsum_scr[pl.ds(row0, tile_n), :] = jnp.sum(s, axis=1, keepdims=True)
    colsum_scr[...] += jnp.sum(s, axis=0, keepdims=True)

    # ---- finalize on the last row tile: normalization + knock-out top-k ---------
    @pl.when(i == n_tiles - 1)
    def _finalize():
        col_ids = lax.broadcasted_iota(jnp.int32, (1, m_pad), 1)
        row_ids = lax.broadcasted_iota(jnp.int32, (n_pad, 1), 0)
        if dual_normalization:
            inv_col = _safe_recip(colsum_scr[...])                        # (1, m_pad)

        # One fused, row-tiled pass: normalize, push masked/padded entries to the
        # -1 sentinel, write back, and record the per-row running max.
        def norm_tile(t, carry):
            r0 = pl.multiple_of(t * tile_n, tile_n)
            s_t = s_scr[pl.ds(r0, tile_n), :]                             # (tile_n, m_pad)
            if dual_normalization:
                inv_row = _safe_recip(rowsum_scr[pl.ds(r0, tile_n), :])   # (tile_n, 1)
                s_norm = (s_t * inv_row) * (s_t * inv_col)
            else:
                s_norm = s_t
            # valid scores are strictly positive; masked/padded entries -> -1 so
            # they are never selected before any valid pair.
            work = jnp.where(s_t > 0.0, s_norm, jnp.float32(-1.0))
            s_scr[pl.ds(r0, tile_n), :] = work
            rowmax_scr[pl.ds(r0, tile_n), :] = jnp.max(work, axis=1, keepdims=True)
            return carry

        lax.fori_loop(0, n_tiles, norm_tile, 0)

        # Top-k: global max over the per-row maxima, then one O(M) row update
        # (knock-out) per selection.  Equality compares are against values re-read
        # from s_scr, which are bit-identical to the stored copies.
        def select(t, carry):
            rm = rowmax_scr[...]                                          # (n_pad, 1)
            m = jnp.max(rm)
            r = jnp.min(jnp.where(rm == m, row_ids, n_pad))               # winning row
            score_out[t] = m
            ridx_out[t] = r
            r_s = ridx_out[t]        # SMEM round-trip -> scalar usable as address
            row = s_scr[pl.ds(r_s, 1), :]                                 # (1, m_pad)
            c = jnp.min(jnp.where(row == m, col_ids, m_pad))              # winning col
            cidx_out[t] = c
            new_row = jnp.where(col_ids == c, jnp.float32(-1.0), row)
            s_scr[pl.ds(r_s, 1), :] = new_row
            rowmax_scr[pl.ds(r_s, 1), :] = jnp.max(new_row, axis=1, keepdims=True)
            return carry

        lax.fori_loop(0, k, select, 0)


def superpoint_matching(ref_feats, src_feats, ref_masks=None, src_masks=None,
                        num_correspondences=8, dual_normalization=True,
                        tile_n=256):
    n, c = ref_feats.shape
    m, c2 = src_feats.shape
    assert c == c2, "feature dims must match"

    if ref_masks is None:
        ref_masks = jnp.ones((n,), dtype=bool)
    if src_masks is None:
        src_masks = jnp.ones((m,), dtype=bool)

    # Features are force-cast to bf16 (halves HBM->VMEM bytes, native MXU rate on
    # v5e/v6e/v7x); the matmul accumulates in f32.  Normalized matching features
    # tolerate bf16 for correspondence selection.
    feat_dtype = jnp.bfloat16
    itemsize = jnp.dtype(feat_dtype).itemsize

    # ---- pad to TPU-friendly shapes: lane dims -> 128, sublane dims -> 8 --------
    tile_n = max(8, (int(tile_n) // 8) * 8)
    tile_n = min(tile_n, _round_up(n, 8))
    n_pad = _round_up(n, tile_n)
    m_pad = _round_up(m, 128)
    c_pad = _round_up(c, 128)
    n_tiles = n_pad // tile_n

    ref_p = jnp.zeros((n_pad, c_pad), feat_dtype).at[:n, :c].set(
        ref_feats.astype(feat_dtype))
    # src is pre-transposed ONCE in HBM so the kernel consumes a canonical (C, M)
    # RHS (no per-grid-step relayout of the resident block inside the kernel).
    src_t = jnp.zeros((c_pad, m_pad), feat_dtype).at[:c, :m].set(
        src_feats.astype(feat_dtype).T)
    rmask = jnp.zeros((n_pad, 1), jnp.float32).at[:n, 0].set(
        ref_masks.astype(jnp.float32))
    smask = jnp.zeros((1, m_pad), jnp.float32).at[0, :m].set(
        src_masks.astype(jnp.float32))

    # TODO(synk): the reference clamps k to the number of *valid* pairs (data
    # dependent); with static shapes we clamp to n*m — if k exceeds the valid pair
    # count the tail correspondences carry the -1 sentinel score.
    k = min(int(num_correspondences), n * m)

    # ---- explicit VMEM budget (resident score scratch is the dominant term) -----
    vmem_needed = (
        n_pad * m_pad * 4                        # resident score scratch
        + 2 * n_pad * 4 + m_pad * 4              # rowsum / rowmax / colsum scratch
        + 2 * c_pad * m_pad * itemsize           # resident src^T (double-buffered)
        + 2 * 8 * m_pad * 4                      # resident smask (double-buffered, padded)
        + 2 * tile_n * c_pad * itemsize          # ref row tile (double-buffered)
        + 2 * tile_n * 128 * 4                   # ref mask tile (double-buffered, padded)
    )
    vmem_cap = _vmem_capacity_bytes()
    headroom = 4 << 20
    if vmem_needed + headroom > vmem_cap:
        # TODO(synk): add an M-column tiling path (2-D grid with per-column-block
        # partial col-sums and a top-k merge) for score matrices that exceed VMEM
        # (notably v7x's 64 MiB per core).
        raise ValueError(
            f"fused SuperPointMatching needs ~{(vmem_needed + headroom) >> 20} MiB VMEM "
            f"(score matrix {n_pad}x{m_pad}); this TPU core has {vmem_cap >> 20} MiB.")
    vmem_limit = int(min(vmem_cap, max(vmem_needed + headroom, 32 << 20)))

    grid_spec = pltpu.PrefetchScalarGridSpec(
        num_scalar_prefetch=0,
        grid=(n_tiles,),
        in_specs=[
            pl.BlockSpec((tile_n, c_pad), lambda i: (i, 0)),   # ref row tile
            # TODO(synk): pipeline_mode=pl.Buffered(1) on the two resident blocks
            # would drop their never-refetched second buffer (VMEM headroom on v7x).
            pl.BlockSpec((c_pad, m_pad), lambda i: (0, 0)),    # full src^T, resident
            pl.BlockSpec((tile_n, 1), lambda i: (i, 0)),       # ref mask tile
            pl.BlockSpec((1, m_pad), lambda i: (0, 0)),        # src mask, resident
        ],
        out_specs=(
            pl.BlockSpec(memory_space=pltpu.MemorySpace.SMEM),  # top-k scores
            pl.BlockSpec(memory_space=pltpu.MemorySpace.SMEM),  # ref indices
            pl.BlockSpec(memory_space=pltpu.MemorySpace.SMEM),  # src indices
        ),
        scratch_shapes=[
            pltpu.VMEM((n_pad, m_pad), jnp.float32),   # resident score matrix
            pltpu.VMEM((n_pad, 1), jnp.float32),       # per-row sums
            pltpu.VMEM((1, m_pad), jnp.float32),       # accumulated column sums
            # TODO(synk): a lane-dense (1, n_pad) running-max layout would shrink the
            # top-k scans further, but needs a sublane->lane relayout per tile.
            pltpu.VMEM((n_pad, 1), jnp.float32),       # per-row running max (top-k)
        ],
    )

    cost = pl.CostEstimate(
        flops=2 * n_pad * m_pad * c_pad + 12 * n_pad * m_pad,
        transcendentals=n_pad * m_pad,
        bytes_accessed=(n_pad * c_pad + c_pad * m_pad) * itemsize
                       + (n_pad + m_pad) * 4 + k * 12,
    )

    scores, ridx, cidx = pl.pallas_call(
        functools.partial(_sp_matching_kernel, tile_n=tile_n, k=k,
                          dual_normalization=dual_normalization),
        out_shape=(jax.ShapeDtypeStruct((k,), jnp.float32),
                   jax.ShapeDtypeStruct((k,), jnp.int32),
                   jax.ShapeDtypeStruct((k,), jnp.int32)),
        grid_spec=grid_spec,
        # single grid axis carries the col-sum accumulation + finalize -> "arbitrary".
        # TODO(synk): splitting ref rows across v7x's 2 TensorCores needs per-core
        # partial col-sums + partial top-k and a small merge step.
        compiler_params=pltpu.CompilerParams(
            dimension_semantics=("arbitrary",),
            vmem_limit_bytes=vmem_limit),
        cost_estimate=cost,
    )(ref_p, src_t, rmask, smask)

    # indices are already into the original (ungathered) ref / src arrays
    return ridx, cidx, scores


if __name__ == "__main__":
    key = jax.random.PRNGKey(0)
    N, M, C, K = 16, 16, 32, 8

    k1, k2 = jax.random.split(key)
    ref_feats = jax.random.normal(k1, (N, C), dtype=jnp.float32)
    src_feats = jax.random.normal(k2, (M, C), dtype=jnp.float32)
    # module expects L2-normalized superpoint features (normalized=True path)
    ref_feats = ref_feats / jnp.linalg.norm(ref_feats, axis=1, keepdims=True)
    src_feats = src_feats / jnp.linalg.norm(src_feats, axis=1, keepdims=True)

    ref_masks = jnp.arange(N) < (N - 3)       # last 3 ref superpoints invalid
    src_masks = jnp.arange(M) < (M - 2)       # last 2 src superpoints invalid

    ref_idx, src_idx, corr_scores = superpoint_matching(
        ref_feats, src_feats, ref_masks, src_masks,
        num_correspondences=K, dual_normalization=True,
        tile_n=8)                              # small tile -> exercises the grid path
    jax.block_until_ready((ref_idx, src_idx, corr_scores))

    # ---- pure-JAX reference (same bf16 input precision as the kernel) -----------
    ref_b = ref_feats.astype(jnp.bfloat16).astype(jnp.float32)
    src_b = src_feats.astype(jnp.bfloat16).astype(jnp.float32)
    xy = ref_b @ src_b.T
    d = jnp.maximum(2.0 - 2.0 * xy, 0.0)
    s = jnp.exp(-d) * ref_masks[:, None] * src_masks[None, :]
    rs = jnp.sum(s, axis=1, keepdims=True)
    cs = jnp.sum(s, axis=0, keepdims=True)
    rs = jnp.where(rs == 0.0, 1.0, rs)
    cs = jnp.where(cs == 0.0, 1.0, cs)
    s2 = (s / rs) * (s / cs)
    ref_vals, _ = lax.top_k(s2.reshape(-1), K)

    assert corr_scores.shape == (K,)
    got_at_idx = s2[ref_idx, src_idx]
    # kernel-reported score matches the exact score at the selected entry
    assert jnp.allclose(corr_scores, got_at_idx, rtol=1e-4, atol=1e-6), (
        corr_scores, got_at_idx)
    # selected values match the exact top-k values (sorted, tie-order agnostic)
    assert jnp.allclose(jnp.sort(corr_scores)[::-1], ref_vals,
                        rtol=1e-4, atol=1e-6), (corr_scores, ref_vals)
    # never selects masked or padded points
    assert bool(jnp.all(ref_masks[ref_idx])) and bool(jnp.all(src_masks[src_idx]))
    assert bool(jnp.all(ref_idx < N)) and bool(jnp.all(src_idx < M))

    print("KERNEL_OK")
</pallas_src>

<mosaic_0001>
module attributes {stable_mosaic.version = 11 : i64} {
  func.func @_sp_matching_kernel(%arg0: i32, %arg1: memref<8x128xbf16, #tpu.memory_space<vmem>>, %arg2: memref<128x128xbf16, #tpu.memory_space<vmem>>, %arg3: memref<8x1xf32, #tpu.memory_space<vmem>>, %arg4: memref<1x128xf32, #tpu.memory_space<vmem>>, %arg5: memref<8xf32, #tpu.memory_space<smem>>, %arg6: memref<8xi32, #tpu.memory_space<smem>>, %arg7: memref<8xi32, #tpu.memory_space<smem>>, %arg8: memref<16x128xf32, #tpu.memory_space<vmem>>, %arg9: memref<16x1xf32, #tpu.memory_space<vmem>>, %arg10: memref<1x128xf32, #tpu.memory_space<vmem>>, %arg11: memref<16x1xf32, #tpu.memory_space<vmem>>) attributes {dimension_semantics = [#tpu.dimension_semantics<arbitrary>], iteration_bounds = array<i64: 2>, scalar_prefetch = 0 : i64, scratch_operands = 4 : i64, tpu.core_type = #tpu.core_type<tc>, window_params = [{transform_indices = @transform_0, window_bounds = array<i64: 8, 128>}, {pipeline_mode = #tpu.pipeline_mode<synchronous>, transform_indices = @transform_1, window_bounds = array<i64: 128, 128>}, {transform_indices = @transform_2, window_bounds = array<i64: 8, 1>}, {pipeline_mode = #tpu.pipeline_mode<synchronous>, transform_indices = @transform_3, window_bounds = array<i64: 1, 128>}, {transform_indices = @transform_4, window_bounds = array<i64: 8>}, {transform_indices = @transform_5, window_bounds = array<i64: 8>}, {transform_indices = @transform_6, window_bounds = array<i64: 8>}]} {
    %c0_i32 = arith.constant 0 : i32
    %0 = arith.cmpi eq, %arg0, %c0_i32 : i32
    %1 = arith.extui %0 : i1 to i32
    %c0_i32_0 = arith.constant 0 : i32
    %2 = arith.cmpi ne, %1, %c0_i32_0 : i32
    scf.if %2 {
      %cst_21 = arith.constant 0.000000e+00 : f32
      %37 = vector.broadcast %cst_21 : f32 to vector<1x128xf32>
      %c0_22 = arith.constant 0 : index
      %c0_23 = arith.constant 0 : index
      %38 = vector.load %arg10[%c0_22, %c0_23] : memref<1x128xf32, #tpu.memory_space<vmem>>, vector<1x128xf32>
      tpu.vector_store %arg10[%c0_22, %c0_23], %37 {strides = array<i32>} : memref<1x128xf32, #tpu.memory_space<vmem>>, vector<1x128xf32>,
    } else {
    }
    %c0 = arith.constant 0 : index
    %c0_1 = arith.constant 0 : index
    %3 = vector.load %arg1[%c0, %c0_1] : memref<8x128xbf16, #tpu.memory_space<vmem>>, vector<8x128xbf16>
    %c0_2 = arith.constant 0 : index
    %c0_3 = arith.constant 0 : index
    %4 = vector.load %arg2[%c0_2, %c0_3] : memref<128x128xbf16, #tpu.memory_space<vmem>>, vector<128x128xbf16>
    %cst = arith.constant dense<0.000000e+00> : vector<8x128xf32>
    %5 = tpu.matmul %3, %4, %cst {dimension_numbers = #tpu.dot_dimension_numbers<[1], [0], [0], [1], [0, 0, 1, 1], [], []>} : vector<8x128xbf16>, vector<128x128xbf16>, vector<8x128xf32> -> vector<8x128xf32>
    %cst_4 = arith.constant 2.000000e+00 : f32
    %6 = vector.broadcast %cst_4 : f32 to vector<8x128xf32>
    %7 = arith.mulf %6, %5 : vector<8x128xf32>
    %cst_5 = arith.constant 2.000000e+00 : f32
    %8 = vector.broadcast %cst_5 : f32 to vector<8x128xf32>
    %9 = arith.subf %8, %7 : vector<8x128xf32>
    %cst_6 = arith.constant 0.000000e+00 : f32
    %10 = vector.broadcast %cst_6 : f32 to vector<8x128xf32>
    %11 = arith.maximumf %9, %10 : vector<8x128xf32>
    %cst_7 = arith.constant 0.000000e+00 : f32
    %12 = vector.broadcast %cst_7 : f32 to vector<8x128xf32>
    %13 = arith.subf %12, %11 : vector<8x128xf32>
    %14 = math.exp %13 : vector<8x128xf32>
    %c0_8 = arith.constant 0 : index
    %c0_9 = arith.constant 0 : index
    %15 = vector.load %arg3[%c0_8, %c0_9] : memref<8x1xf32, #tpu.memory_space<vmem>>, vector<8x1xf32>
    %16 = vector.broadcast %15 : vector<8x1xf32> to vector<8x128xf32>
    %17 = arith.mulf %14, %16 : vector<8x128xf32>
    %c0_10 = arith.constant 0 : index
    %c0_11 = arith.constant 0 : index
    %18 = vector.load %arg4[%c0_10, %c0_11] : memref<1x128xf32, #tpu.memory_space<vmem>>, vector<1x128xf32>
    %19 = vector.broadcast %18 : vector<1x128xf32> to vector<8x128xf32>
    %20 = arith.mulf %17, %19 : vector<8x128xf32>
    %c8_i32 = arith.constant 8 : i32
    %21 = arith.muli %arg0, %c8_i32 : i32
    %22 = tpu.assume_multiple %21, 8 : i32
    %23 = arith.index_cast %22 : i32 to index
    %c0_12 = arith.constant 0 : index
    %24 = vector.load %arg8[%23, %c0_12] : memref<16x128xf32, #tpu.memory_space<vmem>>, vector<8x128xf32>
    tpu.vector_store %arg8[%23, %c0_12], %20 {strides = array<i32>} : memref<16x128xf32, #tpu.memory_space<vmem>>, vector<8x128xf32>,
    %cst_13 = arith.constant dense<0.000000e+00> : vector<8xf32>
    %25 = vector.multi_reduction <add>, %20, %cst_13 [1] : vector<8x128xf32> to vector<8xf32>
    %26 = vector.shape_cast %25 : vector<8xf32> to vector<8x1xf32>
    %27 = arith.index_cast %22 : i32 to index
    %c0_14 = arith.constant 0 : index
    %28 = vector.load %arg9[%27, %c0_14] : memref<16x1xf32, #tpu.memory_space<vmem>>, vector<8x1xf32>
    tpu.vector_store %arg9[%27, %c0_14], %26 {strides = array<i32>} : memref<16x1xf32, #tpu.memory_space<vmem>>, vector<8x1xf32>,
    %c0_15 = arith.constant 0 : index
    %c0_16 = arith.constant 0 : index
    %29 = vector.load %arg10[%c0_15, %c0_16] : memref<1x128xf32, #tpu.memory_space<vmem>>, vector<1x128xf32>
    %cst_17 = arith.constant dense<0.000000e+00> : vector<128xf32>
    %30 = vector.multi_reduction <add>, %20, %cst_17 [0] : vector<8x128xf32> to vector<128xf32>
    %31 = vector.shape_cast %30 : vector<128xf32> to vector<1x128xf32>
    %32 = arith.addf %29, %31 : vector<1x128xf32>
    %c0_18 = arith.constant 0 : index
    %c0_19 = arith.constant 0 : index
    %33 = vector.load %arg10[%c0_18, %c0_19] : memref<1x128xf32, #tpu.memory_space<vmem>>, vector<1x128xf32>
    tpu.vector_store %arg10[%c0_18, %c0_19], %32 {strides = array<i32>} : memref<1x128xf32, #tpu.memory_space<vmem>>, vector<1x128xf32>,
    %c1_i32 = arith.constant 1 : i32
    %34 = arith.cmpi eq, %arg0, %c1_i32 : i32
    %35 = arith.extui %34 : i1 to i32
    %c0_i32_20 = arith.constant 0 : i32
    %36 = arith.cmpi ne, %35, %c0_i32_20 : i32
    scf.if %36 {
      %37 = tpu.iota {dimensions = array<i32: 1>} : vector<1x128xi32>
      %38 = tpu.iota {dimensions = array<i32: 0>} : vector<16x1xi32>
      %c0_21 = arith.constant 0 : index
      %c0_22 = arith.constant 0 : index
      %39 = vector.load %arg10[%c0_21, %c0_22] : memref<1x128xf32, #tpu.memory_space<vmem>>, vector<1x128xf32>
      %cst_23 = arith.constant 0.000000e+00 : f32
      %40 = vector.broadcast %cst_23 : f32 to vector<1x128xf32>
      %41 = arith.cmpf oeq, %39, %40 : vector<1x128xf32>
      %cst_24 = arith.constant 1.000000e+00 : f32
      %42 = vector.broadcast %cst_24 : f32 to vector<1x128xf32>
      %43 = arith.select %41, %42, %39 : vector<1x128xi1>, vector<1x128xf32>
      %44 = tpu.reciprocal %43 {approx = true} : vector<1x128xf32> -> vector<1x128xf32>
      %45 = arith.mulf %43, %44 : vector<1x128xf32>
      %cst_25 = arith.constant 2.000000e+00 : f32
      %46 = vector.broadcast %cst_25 : f32 to vector<1x128xf32>
      %47 = arith.subf %46, %45 : vector<1x128xf32>
      %48 = arith.mulf %44, %47 : vector<1x128xf32>
      %c0_i32_26 = arith.constant 0 : i32
      %c2_i32 = arith.constant 2 : i32
      %49 = arith.addi %c0_i32_26, %c2_i32 : i32
      %c1_i32_27 = arith.constant 1 : i32
      scf.for %arg12 = %c0_i32_26 to %49 step %c1_i32_27  : i32 {
        %c8_i32_33 = arith.constant 8 : i32
        %51 = arith.muli %arg12, %c8_i32_33 : i32
        %52 = tpu.assume_multiple %51, 8 : i32
        %53 = arith.index_cast %52 : i32 to index
        %c0_34 = arith.constant 0 : index
        %54 = vector.load %arg8[%53, %c0_34] : memref<16x128xf32, #tpu.memory_space<vmem>>, vector<8x128xf32>
        %55 = arith.index_cast %52 : i32 to index
        %c0_35 = arith.constant 0 : index
        %56 = vector.load %arg9[%55, %c0_35] : memref<16x1xf32, #tpu.memory_space<vmem>>, vector<8x1xf32>
        %cst_36 = arith.constant 0.000000e+00 : f32
        %57 = vector.broadcast %cst_36 : f32 to vector<8x1xf32>
        %58 = arith.cmpf oeq, %56, %57 : vector<8x1xf32>
        %cst_37 = arith.constant 1.000000e+00 : f32
        %59 = vector.broadcast %cst_37 : f32 to vector<8x1xf32>
        %60 = arith.select %58, %59, %56 : vector<8x1xi1>, vector<8x1xf32>
        %61 = tpu.reciprocal %60 {approx = true} : vector<8x1xf32> -> vector<8x1xf32>
        %62 = arith.mulf %60, %61 : vector<8x1xf32>
        %cst_38 = arith.constant 2.000000e+00 : f32
        %63 = vector.broadcast %cst_38 : f32 to vector<8x1xf32>
        %64 = arith.subf %63, %62 : vector<8x1xf32>
        %65 = arith.mulf %61, %64 : vector<8x1xf32>
        %66 = vector.broadcast %65 : vector<8x1xf32> to vector<8x128xf32>
        %67 = arith.mulf %54, %66 : vector<8x128xf32>
        %68 = vector.broadcast %48 : vector<1x128xf32> to vector<8x128xf32>
        %69 = arith.mulf %54, %68 : vector<8x128xf32>
        %70 = arith.mulf %67, %69 : vector<8x128xf32>
        %cst_39 = arith.constant 0.000000e+00 : f32
        %71 = vector.broadcast %cst_39 : f32 to vector<8x128xf32>
        %72 = arith.cmpf ogt, %54, %71 : vector<8x128xf32>
        %cst_40 = arith.constant -1.000000e+00 : f32
        %73 = vector.broadcast %cst_40 : f32 to vector<8x128xf32>
        %74 = arith.select %72, %70, %73 : vector<8x128xi1>, vector<8x128xf32>
        %75 = arith.index_cast %52 : i32 to index
        %c0_41 = arith.constant 0 : index
        %76 = vector.load %arg8[%75, %c0_41] : memref<16x128xf32, #tpu.memory_space<vmem>>, vector<8x128xf32>
        tpu.vector_store %arg8[%75, %c0_41], %74 {strides = array<i32>} : memref<16x128xf32, #tpu.memory_space<vmem>>, vector<8x128xf32>,
        %cst_42 = arith.constant dense<0xFF800000> : vector<8xf32>
        %77 = vector.multi_reduction <maximumf>, %74, %cst_42 [1] : vector<8x128xf32> to vector<8xf32>
        %78 = vector.shape_cast %77 : vector<8xf32> to vector<8x1xf32>
        %79 = arith.index_cast %52 : i32 to index
        %c0_43 = arith.constant 0 : index
        %80 = vector.load %arg11[%79, %c0_43] : memref<16x1xf32, #tpu.memory_space<vmem>>, vector<8x1xf32>
        tpu.vector_store %arg11[%79, %c0_43], %78 {strides = array<i32>} : memref<16x1xf32, #tpu.memory_space<vmem>>, vector<8x1xf32>,
      }
      %c2_i32_28 = arith.constant 2 : i32
      %c0_i32_29 = arith.constant 0 : i32
      %c8_i32_30 = arith.constant 8 : i32
      %50 = arith.addi %c0_i32_29, %c8_i32_30 : i32
      %c1_i32_31 = arith.constant 1 : i32
      scf.for %arg12 = %c0_i32_29 to %50 step %c1_i32_31  : i32 {
        %c0_33 = arith.constant 0 : index
        %c0_34 = arith.constant 0 : index
        %51 = vector.load %arg11[%c0_33, %c0_34] : memref<16x1xf32, #tpu.memory_space<vmem>>, vector<16x1xf32>
        %52 = vector.shape_cast %51 : vector<16x1xf32> to vector<1x16x1xf32>
        %cst_35 = arith.constant dense<0xFF800000> : vector<1xf32>
        %53 = vector.multi_reduction <maximumf>, %52, %cst_35 [1, 2] : vector<1x16x1xf32> to vector<1xf32>
        %54 = vector.shape_cast %53 : vector<1xf32> to vector<1x1x1xf32>
        %55 = vector.extract %54[0, 0, 0] : f32 from vector<1x1x1xf32>
        %56 = vector.broadcast %55 : f32 to vector<16x1xf32>
        %57 = arith.cmpf oeq, %51, %56 : vector<16x1xf32>
        %c16_i32 = arith.constant 16 : i32
        %58 = vector.broadcast %c16_i32 : i32 to vector<16x1xi32>
        %59 = arith.select %57, %38, %58 : vector<16x1xi1>, vector<16x1xi32>
        %60 = vector.shape_cast %59 : vector<16x1xi32> to vector<1x16x1xi32>
        %cst_36 = arith.constant dense<2147483647> : vector<1xi32>
        %61 = vector.multi_reduction <minsi>, %60, %cst_36 [1, 2] : vector<1x16x1xi32> to vector<1xi32>
        %62 = vector.shape_cast %61 : vector<1xi32> to vector<1x1x1xi32>
        %63 = vector.extract %62[0, 0, 0] : i32 from vector<1x1x1xi32>
        %64 = arith.index_cast %arg12 : i32 to index
        %65 = memref.load %arg5[%64] : memref<8xf32, #tpu.memory_space<smem>>
        memref.store %55, %arg5[%64] : memref<8xf32, #tpu.memory_space<smem>>
        %66 = arith.index_cast %arg12 : i32 to index
        %67 = memref.load %arg6[%66] : memref<8xi32, #tpu.memory_space<smem>>
        memref.store %63, %arg6[%66] : memref<8xi32, #tpu.memory_space<smem>>
        %68 = arith.index_cast %arg12 : i32 to index
        %69 = memref.load %arg6[%68] : memref<8xi32, #tpu.memory_space<smem>>
        %70 = arith.index_cast %69 : i32 to index
        %c0_37 = arith.constant 0 : index
        %71 = vector.load %arg8[%70, %c0_37] : memref<16x128xf32, #tpu.memory_space<vmem>>, vector<1x128xf32>
        %72 = vector.broadcast %55 : f32 to vector<1x128xf32>
        %73 = arith.cmpf oeq, %71, %72 : vector<1x128xf32>
        %c128_i32 = arith.constant 128 : i32
        %74 = vector.broadcast %c128_i32 : i32 to vector<1x128xi32>
        %75 = arith.select %73, %37, %74 : vector<1x128xi1>, vector<1x128xi32>
        %76 = vector.shape_cast %75 : vector<1x128xi32> to vector<1x1x128xi32>
        %cst_38 = arith.constant dense<2147483647> : vector<1xi32>
        %77 = vector.multi_reduction <minsi>, %76, %cst_38 [1, 2] : vector<1x1x128xi32> to vector<1xi32>
        %78 = vector.shape_cast %77 : vector<1xi32> to vector<1x1x1xi32>
        %79 = vector.extract %78[0, 0, 0] : i32 from vector<1x1x1xi32>
        %80 = arith.index_cast %arg12 : i32 to index
        %81 = memref.load %arg7[%80] : memref<8xi32, #tpu.memory_space<smem>>
        memref.store %79, %arg7[%80] : memref<8xi32, #tpu.memory_space<smem>>
        %82 = vector.broadcast %79 : i32 to vector<1x128xi32>
        %83 = arith.cmpi eq, %37, %82 : vector<1x128xi32>
        %cst_39 = arith.constant -1.000000e+00 : f32
        %84 = vector.broadcast %cst_39 : f32 to vector<1x128xf32>
        %85 = arith.select %83, %84, %71 : vector<1x128xi1>, vector<1x128xf32>
        %86 = arith.index_cast %69 : i32 to index
        %c0_40 = arith.constant 0 : index
        %87 = vector.load %arg8[%86, %c0_40] : memref<16x128xf32, #tpu.memory_space<vmem>>, vector<1x128xf32>
        tpu.vector_store %arg8[%86, %c0_40], %85 {strides = array<i32>} : memref<16x128xf32, #tpu.memory_space<vmem>>, vector<1x128xf32>,
        %cst_41 = arith.constant dense<0xFF800000> : vector<1xf32>
        %88 = vector.multi_reduction <maximumf>, %85, %cst_41 [1] : vector<1x128xf32> to vector<1xf32>
        %89 = vector.shape_cast %88 : vector<1xf32> to vector<1x1xf32>
        %90 = arith.index_cast %69 : i32 to index
        %c0_42 = arith.constant 0 : index
        %91 = vector.load %arg11[%90, %c0_42] : memref<16x1xf32, #tpu.memory_space<vmem>>, vector<1x1xf32>
        tpu.vector_store %arg11[%90, %c0_42], %89 {strides = array<i32>} : memref<16x1xf32, #tpu.memory_space<vmem>>, vector<1x1xf32>,
      }
      %c8_i32_32 = arith.constant 8 : i32
    } else {
    }
    return
  }
  func.func @transform_0(%arg0: i32) -> (i32, i32) {
    %c0_i32 = arith.constant 0 : i32
    %c0_i32_0 = arith.constant 0 : i32
    return %arg0, %c0_i32 : i32, i32
  }
  func.func @transform_1(%arg0: i32) -> (i32, i32) {
    %c0_i32 = arith.constant 0 : i32
    %c0_i32_0 = arith.constant 0 : i32
    %c0_i32_1 = arith.constant 0 : i32
    return %c0_i32, %c0_i32_0 : i32, i32
  }
  func.func @transform_2(%arg0: i32) -> (i32, i32) {
    %c0_i32 = arith.constant 0 : i32
    %c0_i32_0 = arith.constant 0 : i32
    return %arg0, %c0_i32 : i32, i32
  }
  func.func @transform_3(%arg0: i32) -> (i32, i32) {
    %c0_i32 = arith.constant 0 : i32
    %c0_i32_0 = arith.constant 0 : i32
    %c0_i32_1 = arith.constant 0 : i32
    return %c0_i32, %c0_i32_0 : i32, i32
  }
  func.func @transform_4(%arg0: i32) -> i32 {
    %c0_i32 = arith.constant 0 : i32
    %c0_i32_0 = arith.constant 0 : i32
    return %c0_i32 : i32
  }
  func.func @transform_5(%arg0: i32) -> i32 {
    %c0_i32 = arith.constant 0 : i32
    %c0_i32_0 = arith.constant 0 : i32
    return %c0_i32 : i32
  }
  func.func @transform_6(%arg0: i32) -> i32 {
    %c0_i32 = arith.constant 0 : i32
    %c0_i32_0 = arith.constant 0 : i32
    return %c0_i32 : i32
  }
}

</mosaic_0001>

<llo_original>
// kernel: tpu_custom_call.1
$region0: #{tpu_custom_call.1}
  #allocation0 [shape = 'u32[]', space=smem, size = 0x4, offset = 0x4, fixed_abs, tag = 'smem constant byte address 0x4 - core index']
  #allocation1 [shape = 'u32[144,128]{1,0:T(1,128)}', space=vmem, size = 0x12000, scoped, tag = 'internal scratch']
  #allocation2 [shape = 'f32[16,128]{1,0:T(8,128)}', space=vmem, size = 0x2000, scoped, tag = 'scratch operand']
  #allocation3 [shape = 'f32[16,1]{1,0:T(8,128)}', space=vmem, size = 0x2000, scoped, tag = 'scratch operand']
  #allocation4 [shape = 'f32[1,128]{1,0:T(1,128)}', space=vmem, size = 0x200, scoped, tag = 'scratch operand']
  #allocation5 [shape = 'f32[16,1]{1,0:T(8,128)}', space=vmem, size = 0x2000, scoped, tag = 'scratch operand']
  %s0 = inlined_call_operand.vmem [shape: bf16[16,128], index: 0, kind: input, shape index: {}]
  %s1 = inlined_call_operand.hbm [shape: bf16[128,128], index: 1, kind: input, shape index: {}]
  %s2 = inlined_call_operand.vmem [shape: f32[16,1], index: 2, kind: input, shape index: {}]
  %s3 = inlined_call_operand.vmem [shape: f32[1,128], index: 3, kind: input, shape index: {}]
  %s4 = inlined_call_operand.hbm [shape: f32[8], index: 4, kind: output, shape index: {0}]
  %s5 = inlined_call_operand.hbm [shape: s32[8], index: 5, kind: output, shape index: {1}]
  %s6 = inlined_call_operand.hbm [shape: s32[8], index: 6, kind: output, shape index: {2}]
  %7 = xla_tuple %s4, %s5, %s6
  %s8 = sld [smem:[#allocation0]]
  $region91: #{tpu_custom_call.1} parent=0
    _
  %s10 = ssub.s32 1, %s8
  %s11 = scalar_select 0, %s10, %s8
  $region1: #{tpu_custom_call.1} parent=0
    #allocation6 [shape = 'u8[32768]{0}', space=vmem, size = 0x8000, scoped, tag = 'input window, operand 1, single buffered']
    #allocation7 [shape = 's32[2]{0}', space=sflag, size = 0x8, scoped, tag = 'scoped memory for tpu_custom_call.1']
    #allocation8 [shape = 's32[2]{0}', space=sflag, size = 0x8, scoped, tag = 'scoped memory for tpu_custom_call.1']
    #allocation9 [shape = 'u8[512]{0}', space=smem, size = 0x200, scoped, tag = 'output window, operand 0, single buffered']
    #allocation10 [shape = 'u8[512]{0}', space=smem, size = 0x200, scoped, tag = 'output window, operand 1, single buffered']
    #allocation11 [shape = 's32[1]{0}', space=sflag, size = 0x4, scoped, tag = 'scoped memory for tpu_custom_call.1']
    #allocation12 [shape = 'u8[512]{0}', space=smem, size = 0x200, scoped, tag = 'output window, operand 2, single buffered']
    %12 = vsyncpa [#allocation7], 0
    %13 = vsyncpa [#allocation8], 0
    %14 = vsyncpa [#allocation11], 0
    loop: start=0, step=1, limit=4
    $region2: #{tpu_custom_call.1} parent=1 // loop_pre_header
      _
    $region3: #{tpu_custom_call.1} parent=1 // loop_header
      %s16 = sphi 0, %s20
      %p17 = scmp.ge.s32.totalorder %s16, 4
      %s26 = sphi 0, %s28
      %s29 = sphi 0, %s26
      %s30 = sphi 0, %s29
      %s46 = sphi 0, %s30
      %s50 = sphi 0, %s50
      %s52 = sphi 0, %s50
      %s53 = sphi 0, %s52
      %s67 = sphi 0, %s53
      %s73 = sphi 0, %s75
      %s76 = sphi 0, %s73
      %s77 = sphi 0, %s76
      %s93 = sphi 0, %s77
      %s97 = sphi 0, %s97
      %s99 = sphi 0, %s97
      %s100 = sphi 0, %s99
      %s114 = sphi 0, %s100
      %s118 = sphi 0, %s118
      %s120 = sphi 0, %s118
      %s121 = sphi 0, %s120
      %s135 = sphi 0, %s121
      %s139 = sphi 0, %s139
      %s141 = sphi 0, %s139
      %s142 = sphi 0, %s141
      %s156 = sphi 0, %s142
      %s160 = sphi 0, %s160
      %s162 = sphi 0, %s160
      %s163 = sphi 0, %s162
      %s177 = sphi 0, %s163
    $region4: #{tpu_custom_call.1} parent=1 // loop_header_branch
      %19 = sbr.rel (%p17) target = $region8
    $region5: #{tpu_custom_call.1} parent=1 // loop_body
      %s21 = ssub.s32 %s16, 1
      %s22 = ssub.s32 %s16, 2
      %s23 = sadd.s32 %s16, 1
      %s24 = ssub.s32 %s16, %s23
      %p25 = scmp.eq.s32.totalorder %s24, 0
      %s27 = sadd.s32 %s26, 1
      %s28 = scalar_select %p25, %s26, %s27
      %p31 = pneg %p25
      %p32 = scmp.eq.s32.totalorder %s16, 1
      %p33 = por %p31, %p32
      %p34 = scmp.ne.s32.totalorder %s26, %s29
      %p35 = scmp.eq.s32.totalorder %s16, 0
      %p36 = por %p34, %p35
      %p37 = scmp.ne.s32.totalorder %s26, %s29
      %p38 = scmp.eq.s32.totalorder %s21, 1
      %p39 = por %p37, %p38
      %p40 = scmp.ne.s32.totalorder %s29, %s30
      %p41 = scmp.eq.s32.totalorder %s21, 0
      %p42 = por %p40, %p41
      %p43 = scmp.ne.s32.totalorder %s29, %s30
      %p44 = scmp.eq.s32.totalorder %s22, 1
      %p45 = por %p43, %p44
      %p47 = scmp.ne.s32.totalorder %s30, %s46
      %p48 = scmp.eq.s32.totalorder %s22, 0
      %p49 = por %p47, %p48
      %s51 = sadd.s32 %s50, 1
      %p54 = scmp.eq.s32.totalorder %s16, 1
      %p55 = scmp.ne.s32.totalorder %s50, %s52
      %p56 = scmp.eq.s32.totalorder %s16, 0
      %p57 = por %p55, %p56
      %p58 = scmp.ne.s32.totalorder %s50, %s52
      %p59 = scmp.eq.s32.totalorder %s21, 1
      %p60 = por %p58, %p59
      %p61 = scmp.ne.s32.totalorder %s52, %s53
      %p62 = scmp.eq.s32.totalorder %s21, 0
      %p63 = por %p61, %p62
      %p64 = scmp.ne.s32.totalorder %s52, %s53
      %p65 = scmp.eq.s32.totalorder %s22, 1
      %p66 = por %p64, %p65
      %p68 = scmp.ne.s32.totalorder %s53, %s67
      %p69 = scmp.eq.s32.totalorder %s22, 0
      %p70 = por %p68, %p69
      %s71 = ssub.s32 %s16, %s23
      %p72 = scmp.eq.s32.totalorder %s71, 0
      %s74 = sadd.s32 %s73, 1
      %s75 = scalar_select %p72, %s73, %s74
      %p78 = pneg %p72
      %p79 = scmp.eq.s32.totalorder %s16, 1
      %p80 = por %p78, %p79
      %p81 = scmp.ne.s32.totalorder %s73, %s76
      %p82 = scmp.eq.s32.totalorder %s16, 0
      %p83 = por %p81, %p82
      %p84 = scmp.ne.s32.totalorder %s73, %s76
      %p85 = scmp.eq.s32.totalorder %s21, 1
      %p86 = por %p84, %p85
      %p87 = scmp.ne.s32.totalorder %s76, %s77
      %p88 = scmp.eq.s32.totalorder %s21, 0
      %p89 = por %p87, %p88
      %p90 = scmp.ne.s32.totalorder %s76, %s77
      %p91 = scmp.eq.s32.totalorder %s22, 1
      %p92 = por %p90, %p91
      %p94 = scmp.ne.s32.totalorder %s77, %s93
      %p95 = scmp.eq.s32.totalorder %s22, 0
      %p96 = por %p94, %p95
      %s98 = sadd.s32 %s97, 1
      %p101 = scmp.eq.s32.totalorder %s16, 1
      %p102 = scmp.ne.s32.totalorder %s97, %s99
      %p103 = scmp.eq.s32.totalorder %s16, 0
      %p104 = por %p102, %p103
      %p105 = scmp.ne.s32.totalorder %s97, %s99
      %p106 = scmp.eq.s32.totalorder %s21, 1
      %p107 = por %p105, %p106
      %p108 = scmp.ne.s32.totalorder %s99, %s100
      %p109 = scmp.eq.s32.totalorder %s21, 0
      %p110 = por %p108, %p109
      %p111 = scmp.ne.s32.totalorder %s99, %s100
      %p112 = scmp.eq.s32.totalorder %s22, 1
      %p113 = por %p111, %p112
      %p115 = scmp.ne.s32.totalorder %s100, %s114
      %p116 = scmp.eq.s32.totalorder %s22, 0
      %p117 = por %p115, %p116
      %s119 = sadd.s32 %s118, 1
      %p122 = scmp.eq.s32.totalorder %s16, 1
      %p123 = scmp.ne.s32.totalorder %s118, %s120
      %p124 = scmp.eq.s32.totalorder %s16, 0
      %p125 = por %p123, %p124
      %p126 = scmp.ne.s32.totalorder %s118, %s120
      %p127 = scmp.eq.s32.totalorder %s21, 1
      %p128 = por %p126, %p127
      %p129 = scmp.ne.s32.totalorder %s120, %s121
      %p130 = scmp.eq.s32.totalorder %s21, 0
      %p131 = por %p129, %p130
      %p132 = scmp.ne.s32.totalorder %s120, %s121
      %p133 = scmp.eq.s32.totalorder %s22, 1
      %p134 = por %p132, %p133
      %p136 = scmp.ne.s32.totalorder %s121, %s135
      %p137 = scmp.eq.s32.totalorder %s22, 0
      %p138 = por %p136, %p137
      %s140 = sadd.s32 %s139, 1
      %p143 = scmp.eq.s32.totalorder %s16, 1
      %p144 = scmp.ne.s32.totalorder %s139, %s141
      %p145 = scmp.eq.s32.totalorder %s16, 0
      %p146 = por %p144, %p145
      %p147 = scmp.ne.s32.totalorder %s139, %s141
      %p148 = scmp.eq.s32.totalorder %s21, 1
      %p149 = por %p147, %p148
      %p150 = scmp.ne.s32.totalorder %s141, %s142
      %p151 = scmp.eq.s32.totalorder %s21, 0
      %p152 = por %p150, %p151
      %p153 = scmp.ne.s32.totalorder %s141, %s142
      %p154 = scmp.eq.s32.totalorder %s22, 1
      %p155 = por %p153, %p154
      %p157 = scmp.ne.s32.totalorder %s142, %s156
      %p158 = scmp.eq.s32.totalorder %s22, 0
      %p159 = por %p157, %p158
      %s161 = sadd.s32 %s160, 1
      %p164 = scmp.eq.s32.totalorder %s16, 1
      %p165 = scmp.ne.s32.totalorder %s160, %s162
      %p166 = scmp.eq.s32.totalorder %s16, 0
      %p167 = por %p165, %p166
      %p168 = scmp.ne.s32.totalorder %s160, %s162
      %p169 = scmp.eq.s32.totalorder %s21, 1
      %p170 = por %p168, %p169
      %p171 = scmp.ne.s32.totalorder %s162, %s163
      %p172 = scmp.eq.s32.totalorder %s21, 0
      %p173 = por %p171, %p172
      %p174 = scmp.ne.s32.totalorder %s162, %s163
      %p175 = scmp.eq.s32.totalorder %s22, 1
      %p176 = por %p174, %p175
      %p178 = scmp.ne.s32.totalorder %s163, %s177
      %p179 = scmp.eq.s32.totalorder %s22, 0
      %p180 = por %p178, %p179
      %p181 = scmp.le.s32.totalorder 1, %s16
      %p182 = scmp.lt.s32.totalorder %s16, 3
      %p183 = pnand %p181, %p182
      %p184 = pneg %p183
      // Predicated region
      $region9: #{tpu_custom_call.1} parent=5 // pred_check
        _
      $region10: #{tpu_custom_call.1} parent=5 // pred_check_branch
        %186 = sbr.rel (%p183) target = $region12
      $region11: #{tpu_custom_call.1} parent=5 // pred_region
        %s187 = ssub.s32 %s16, 1
        // Predicated region
        $region13: #{tpu_custom_call.1} parent=11 // pred_check
          %p188 = pneg %p63
        $region14: #{tpu_custom_call.1} parent=11 // pred_check_branch
          %190 = sbr.rel (%p188) target = $region16
        $region15: #{tpu_custom_call.1} parent=11 // pred_region
          %s192 = ssub.s32 1024, 1024
          %193 = vsyncadd [#allocation7], %s192
          %s194 = sshll.u32 [#allocation6], 4
          %s195 = int_to_ptr.vmem [resolvable:$true] %s194
          %200 = dma.hbm_to_vmem [thread:$0]  %s1, 1024, %s195, [#allocation7], 64, 64, 4
        $region16: #{tpu_custom_call.1} parent=11 // pred_fallthru
          _
        // Predicated region
        $region17: #{tpu_custom_call.1} parent=11 // pred_check
          %p201 = pneg %p110
        $region18: #{tpu_custom_call.1} parent=11 // pred_check_branch
          %203 = sbr.rel (%p201) target = $region20
        $region19: #{tpu_custom_call.1} parent=11 // pred_region
          _
        $region20: #{tpu_custom_call.1} parent=11 // pred_fallthru
          _
      $region12: #{tpu_custom_call.1} parent=5 // pred_fallthru
        _
      %p204 = scmp.lt.s32.totalorder %s16, 2
      // Predicated region
      $region21: #{tpu_custom_call.1} parent=5 // pred_check
        %p205 = pneg %p204
      $region22: #{tpu_custom_call.1} parent=5 // pred_check_branch
        %207 = sbr.rel (%p205) target = $region24
      $region23: #{tpu_custom_call.1} parent=5 // pred_region
        // Predicated region
        $region25: #{tpu_custom_call.1} parent=23 // pred_check
          %p208 = pneg %p36
        $region26: #{tpu_custom_call.1} parent=23 // pred_check_branch
          %210 = sbr.rel (%p208) target = $region28
        $region27: #{tpu_custom_call.1} parent=23 // pred_region
          %p211 = scmp.lt.s32.totalorder %s16, 1
          %s212 = scalar_select %p211, %s16, 1
          %s213 = smul.addr %s212, 4
          %s214 = scalar_lea.vmem %s0, %s213
        $region28: #{tpu_custom_call.1} parent=23 // pred_fallthru
          _
        // Predicated region
        $region29: #{tpu_custom_call.1} parent=23 // pred_check
          %p215 = pneg %p83
        $region30: #{tpu_custom_call.1} parent=23 // pred_check_branch
          %217 = sbr.rel (%p215) target = $region32
        $region31: #{tpu_custom_call.1} parent=23 // pred_region
          %p218 = scmp.lt.s32.totalorder %s16, 1
          %s219 = scalar_select %p218, %s16, 1
          %s220 = smul.addr %s219, 8
          %s221 = scalar_lea.vmem %s2, %s220
        $region32: #{tpu_custom_call.1} parent=23 // pred_fallthru
          _
      $region24: #{tpu_custom_call.1} parent=5 // pred_fallthru
        _
      %p222 = scmp.le.s32.totalorder 1, %s16
      %p223 = scmp.lt.s32.totalorder %s16, 3
      %p224 = pnand %p222, %p223
      %p225 = pneg %p224
      // Predicated region
      $region33: #{tpu_custom_call.1} parent=5 // pred_check
        _
      $region34: #{tpu_custom_call.1} parent=5 // pred_check_branch
        %227 = sbr.rel (%p224) target = $region36
      $region35: #{tpu_custom_call.1} parent=5 // pred_region
        %s228 = ssub.s32 %s16, 1
        // Predicated region
        $region37: #{tpu_custom_call.1} parent=35 // pred_check
          %p229 = pneg %p63
        $region38: #{tpu_custom_call.1} parent=35 // pred_check_branch
          %231 = sbr.rel (%p229) target = $region40
        $region39: #{tpu_custom_call.1} parent=35 // pred_region
          %232 = dma.done [#allocation7], 1024
        $region40: #{tpu_custom_call.1} parent=35 // pred_fallthru
          _
        %p233 = scmp.lt.s32.totalorder %s21, 1
        %s234 = scalar_select %p233, %s21, 1
        %s235 = smul.addr %s234, 4
        %s236 = scalar_lea.vmem %s0, %s235
        %p237 = pneg %p42
        %p238 = pneg %p39
        %p239 = pneg %p63
        %p240 = pneg %p60
        %p241 = scmp.lt.s32.totalorder %s21, 1
        %s242 = scalar_select %p241, %s21, 1
        %s243 = smul.addr %s242, 8
        %s244 = scalar_lea.vmem %s2, %s243
        %p245 = pneg %p89
        %p246 = pneg %p86
        %p247 = pneg %p110
        %p248 = pneg %p107
        %p249 = pneg %p131
        %p250 = pneg %p128
        %p251 = pneg %p152
        %p252 = pneg %p149
        %p253 = pneg %p173
        %p254 = pneg %p170
        %p255 = scmp.lt.s32.totalorder %s21, 1
        %s256 = scalar_select %p255, %s21, 1
        %s257 = smul.addr %s256, 4
        %s258 = scalar_lea.vmem %s0, %s257
        %p259 = scmp.lt.s32.totalorder %s21, 1
        %s260 = scalar_select %p259, %s21, 1
        %s261 = smul.addr %s260, 8
        %s262 = scalar_lea.vmem %s2, %s261
        %p264 = scmp.eq.s32.totalorder %s21, 0
        // Predicated region
        $region41: #{tpu_custom_call.1} parent=35 // pred_check
          %p265 = pneg %p264
        $region42: #{tpu_custom_call.1} parent=35 // pred_check_branch
          %267 = sbr.rel (%p265) target = $region44
        $region43: #{tpu_custom_call.1} parent=35 // pred_region
          %268 = vst [vmem:[#allocation4] sm:$0x1] 0.0
        $region44: #{tpu_custom_call.1} parent=35 // pred_fallthru
          _
        %v269 = vld [vmem:[%s258] sm:$0xf]
        %v270 = vld [vmem:[#allocation6] sm:$0xf]
        %v271 = vld [vmem:[#allocation6 + $0x4] sm:$0xf]
        %v272 = vld [vmem:[#allocation6 + $0x8] sm:$0xf]
        %v273 = vld [vmem:[#allocation6 + $0xc] sm:$0xf]
        %v274 = vld [vmem:[#allocation6 + $0x10] sm:$0xf]
        %v275 = vld [vmem:[#allocation6 + $0x14] sm:$0xf]
        %v276 = vld [vmem:[#allocation6 + $0x18] sm:$0xf]
        %v277 = vld [vmem:[#allocation6 + $0x1c] sm:$0xf]
        %v278 = vld [vmem:[#allocation6 + $0x20] sm:$0xf]
        %v279 = vld [vmem:[#allocation6 + $0x24] sm:$0xf]
        %v280 = vld [vmem:[#allocation6 + $0x28] sm:$0xf]
        %v281 = vld [vmem:[#allocation6 + $0x2c] sm:$0xf]
        %v282 = vld [vmem:[#allocation6 + $0x30] sm:$0xf]
        %v283 = vld [vmem:[#allocation6 + $0x34] sm:$0xf]
        %v284 = vld [vmem:[#allocation6 + $0x38] sm:$0xf]
        %v285 = vld [vmem:[#allocation6 + $0x3c] sm:$0xf]
        %v302 = vunpack.c.l.b16 %v270
        %v303 = vunpack.c.l.b16 %v271
        %v304 = vunpack.c.l.b16 %v272
        %v305 = vunpack.c.l.b16 %v273
        %v306 = vunpack.c.l.b16 %v274
        %v307 = vunpack.c.l.b16 %v275
        %v308 = vunpack.c.l.b16 %v276
        %v309 = vunpack.c.l.b16 %v277
        %v310 = vunpack.c.l.b16 %v278
        %v311 = vunpack.c.l.b16 %v279
        %v312 = vunpack.c.l.b16 %v280
        %v313 = vunpack.c.l.b16 %v281
        %v314 = vunpack.c.l.b16 %v282
        %v315 = vunpack.c.l.b16 %v283
        %v316 = vunpack.c.l.b16 %v284
        %v317 = vunpack.c.l.b16 %v285
        %v318 = vpack.c.b16 %v303, %v302
        %v319 = vpack.c.b16 %v305, %v304
        %v320 = vpack.c.b16 %v307, %v306
        %v321 = vpack.c.b16 %v309, %v308
        %v322 = vpack.c.b16 %v311, %v310
        %v323 = vpack.c.b16 %v313, %v312
        %v324 = vpack.c.b16 %v315, %v314
        %v325 = vpack.c.b16 %v317, %v316
        %334 = vmatprep.subr.bf16.mxu0 0
        %335 = vmatpush1.bf16.msra.mxu0 %v318
        %336 = vmatprep.subr.bf16.mxu0 0
        %337 = vmatpush1.bf16.msra.mxu0 %v319
        %338 = vmatprep.subr.bf16.mxu0 0
        %339 = vmatpush1.bf16.msra.mxu0 %v320
        %340 = vmatprep.subr.bf16.mxu0 0
        %341 = vmatpush1.bf16.msra.mxu0 %v321
        %342 = vmatprep.subr.bf16.mxu0 0
        %343 = vmatpush1.bf16.msra.mxu0 %v322
        %344 = vmatprep.subr.bf16.mxu0 0
        %345 = vmatpush1.bf16.msra.mxu0 %v323
        %346 = vmatprep.subr.bf16.mxu0 0
        %347 = vmatpush1.bf16.msra.mxu0 %v324
        %348 = vmatprep.subr.bf16.mxu0 0
        %349 = vmatpush1.bf16.msra.mxu0 %v325
        %350 = vmatprep.subr.bf16.mxu0 0
        %351 = vmatpush1.bf16.msra.mxu0 0
        %352 = vmatprep.subr.bf16.mxu0 0
        %353 = vmatpush1.bf16.msra.mxu0 0
        %354 = vmatprep.subr.bf16.mxu0 0
        %355 = vmatpush1.bf16.msra.mxu0 0
        %356 = vmatprep.subr.bf16.mxu0 0
        %357 = vmatpush1.bf16.msra.mxu0 0
        %358 = vmatprep.subr.bf16.mxu0 0
        %359 = vmatpush1.bf16.msra.mxu0 0
        %360 = vmatprep.subr.bf16.mxu0 0
        %361 = vmatpush1.bf16.msra.mxu0 0
        %362 = vmatprep.subr.bf16.mxu0 0
        %363 = vmatpush1.bf16.msra.mxu0 0
        %364 = vmatprep.subr.bf16.mxu0 0
        %365 = vmatpush1.bf16.msra.mxu0 0
        %366 = vmatprep.mubr.bf16.mxu0 0
        %367 = vmatmul.mubr.bf16.gmra.mrb[0].mxu0 %v269
        %v368 = vpop.f32.mrb[0].mxu0
        %v369 = vadd.f32 0.0, %v368
        %v370 = vpop.f32.mrb[0].mxu0
        %v371 = vpop.f32.mrb[0].mxu0
        %v372 = vpop.f32.mrb[0].mxu0
        %373 = vdwg.mxu0
        %v374 = vmul.f32 %v369, 2.0
        %v375 = vsub.f32 2.0, %v374
        %v376 = vmax.f32 %v375, 0.0
        %v377 = vsub.f32 0.0, %v376
        %v378 = vmul.f32 %v377, 1.442695
        %v379 = vpow.pop %v378
        %v380 = vld [vmem:[%s262] sm:$0xff]
        %382 = vset.pattern.permute.xlu0 0
        %383 = vperm.xlu0 %382, %v380
        %v384 = vpop.permute.xlu0 %383
        %v386 = vmul.f32 %v379, %v384
        %v387 = vld [vmem:[%s3] sm:$0x1]
        %v389 = vlaneseq
        %v390 = vshrl.u32 %v389, 7
        %v391 = vsub.s32 0, %v390
        %v392 = vrot.slane %v387, %v391
        %v394 = vmul.f32 %v386, %v392
        %s395 = smul.u32 %s21, 8
        %s396 = scalar_lea.vmem [#allocation2], %s395
        %397 = vst [vmem:[%s396] sm:$0xff] %v394
        %398 = vadd.xlane.f32.xlu0 %v394
        %v399 = vpop.xlane.xlu0 %398
        %s400 = scalar_lea.vmem [#allocation3], %s395
        %vm401 = vcmask 7168
        %402 = vst.msk [vmem:[%s400] sm:$0xff] %vm401, %v399
        %v403 = vld [vmem:[#allocation4] sm:$0x1]
        %v404 = vrot.slane %v394, 4
        %v405 = vadd.f32 %v394, %v404
        %v406 = vrot.slane %v405, 2
        %v407 = vadd.f32 %v405, %v406
        %v408 = vrot.slane %v407, 1
        %v409 = vadd.f32 %v407, %v408
        %v410 = vadd.f32 %v403, %v409
        %411 = vst [vmem:[#allocation4] sm:$0x1] %v410
        %p412 = scmp.eq.s32.totalorder %s21, 1
        // Predicated region
        $region45: #{tpu_custom_call.1} parent=35 // pred_check
          %p413 = pneg %p412
        $region46: #{tpu_custom_call.1} parent=35 // pred_check_branch
          %415 = sbr.rel (%p413) target = $region48
        $region47: #{tpu_custom_call.1} parent=35 // pred_region
          %v416 = vlaneseq
          %v417 = vand.u32 %v416, 127
          %v418 = vlaneseq
          %v419 = vshrl.u32 %v418, 7
          %v420 = vadd.s32 %v419, 8
          %v421 = vld [vmem:[#allocation4] sm:$0x1]
          %vm422 = vcmp.eq.f32.partialorder %v421, 0.0
          %v423 = vsel %vm422, 1.0, %v421
          %v424 = vrcp.pop %v423
          %v425 = vmul.f32 %v423, %v424
          %v426 = vsub.f32 2.0, %v425
          %v427 = vmul.f32 %v424, %v426
          loop: start=0, step=1, limit=2
          $region49: #{tpu_custom_call.1} parent=47 // loop_pre_header
            _
          $region50: #{tpu_custom_call.1} parent=47 // loop_header
            %s429 = sphi 0, %s433
            %p430 = scmp.ge.s32.totalorder %s429, 2
          $region51: #{tpu_custom_call.1} parent=47 // loop_header_branch
            %432 = sbr.rel (%p430) target = $region55
          $region52: #{tpu_custom_call.1} parent=47 // loop_body
            %s434 = smul.u32 %s429, 8
            %s435 = scalar_lea.vmem [#allocation2], %s434
            %v436 = vld [vmem:[%s435] sm:$0xff]
            %s437 = scalar_lea.vmem [#allocation3], %s434
            %v438 = vld [vmem:[%s437] sm:$0xff]
            %vm439 = vcmp.eq.f32.partialorder %v438, 0.0
            %v440 = vsel %vm439, 1.0, %v438
            %v441 = vrcp.pop %v440
            %v442 = vmul.f32 %v440, %v441
            %v443 = vsub.f32 2.0, %v442
            %v444 = vmul.f32 %v441, %v443
            %446 = vset.pattern.permute.xlu0 0
            %447 = vperm.xlu0 %446, %v444
            %v448 = vpop.permute.xlu0 %447
            %v450 = vmul.f32 %v436, %v448
            %v452 = vlaneseq
            %v453 = vshrl.u32 %v452, 7
            %v454 = vsub.s32 0, %v453
            %v455 = vrot.slane %v427, %v454
            %v457 = vmul.f32 %v436, %v455
            %v458 = vmul.f32 %v450, %v457
            %vm459 = vcmp.gt.f32.partialorder %v436, 0.0
            %v460 = vsel %vm459, %v458, -1.0
            %461 = vst [vmem:[%s435] sm:$0xff] %v460
            %462 = vmax.xlane.f32.xlu0 %v460
            %v463 = vpop.xlane.xlu0 %462
            %s464 = scalar_lea.vmem [#allocation5], %s434
            %465 = vst.msk [vmem:[%s464] sm:$0xff] %vm401, %v463
          $region53: #{tpu_custom_call.1} parent=47 // loop_footer
            %s433 = sadd.s32 1, %s429
          $region54: #{tpu_custom_call.1} parent=47 // loop_footer_branch
            %428 = sbr.rel target = $region50
          $region55: #{tpu_custom_call.1} parent=47 // loop_exit
            _
          loop: start=0, step=1, limit=8
          $region56: #{tpu_custom_call.1} parent=47 // loop_pre_header
            _
          $region57: #{tpu_custom_call.1} parent=47 // loop_header
            %s467 = sphi 0, %s471
            %p468 = scmp.ge.s32.totalorder %s467, 8
          $region58: #{tpu_custom_call.1} parent=47 // loop_header_branch
            %470 = sbr.rel (%p468) target = $region62
          $region59: #{tpu_custom_call.1} parent=47 // loop_body
            %v472 = vld [vmem:[#allocation5] sm:$0xff]
            %v473 = vld [vmem:[#allocation5 + $0x8] sm:$0xff]
            %v474 = vsel %vm401, %v472, -inf
            %v475 = vsel %vm401, %v473, -inf
            %v476 = vmax.f32 %v474, %v475
            %477 = vmax.xlane.f32.xlu0 %v476
            %v478 = vpop.xlane.xlu0 %477
            %v479 = vrot.slane %v478, 4
            %v480 = vmax.f32 %v478, %v479
            %v481 = vrot.slane %v480, 2
            %v482 = vmax.f32 %v480, %v481
            %v483 = vrot.slane %v482, 1
            %v484 = vmax.f32 %v482, %v483
            %s485 = vtos %v484
            %v486 = vstv %s485
            %vm487 = vcmp.eq.f32.partialorder %v472, %v486
            %vm488 = vcmp.eq.f32.partialorder %v473, %v486
            %v489 = vsel %vm487, %v419, 16
            %v490 = vsel %vm488, %v420, 16
            %v491 = vsel %vm401, %v489, 2147483647
            %v492 = vsel %vm401, %v490, 2147483647
            %vm493 = vcmp.lt.s32.totalorder %v491, %v492
            %v494 = vsel %vm493, %v491, %v492
            %v495 = vand.u32 %v494, 65535
            %v496 = vshra.s32 %v494, 16
            %v497 = vcvt.s32.f32 %v495
            %v498 = vcvt.s32.f32 %v496
            %499 = vmin.xlane.f32.xlu0 %v498
            %v500 = vpop.xlane.xlu0 %499
            %vm501 = vcmp.eq.f32.partialorder %v498, %v500
            %v502 = vsel %vm501, %v497, inf
            %503 = vmin.xlane.f32.xlu0 %v502
            %v504 = vpop.xlane.xlu0 %503
            %v505 = vcvt.f32.s32 %v504
            %v506 = vcvt.f32.s32 %v500
            %v507 = vshll.u32 %v506, 16
            %v508 = vadd.s32 %v507, %v505
            %v509 = vrot.slane %v508, 4
            %vm510 = vcmp.lt.s32.totalorder %v508, %v509
            %v511 = vsel %vm510, %v508, %v509
            %v512 = vrot.slane %v511, 2
            %vm513 = vcmp.lt.s32.totalorder %v511, %v512
            %v514 = vsel %vm513, %v511, %v512
            %v515 = vrot.slane %v514, 1
            %vm516 = vcmp.lt.s32.totalorder %v514, %v515
            %v517 = vsel %vm516, %v514, %v515
            %s518 = vtos %v517
            %s519 = scalar_lea.smem [#allocation9], %s467
            %520 = sst [smem:[%s519]] %s485
            %s521 = scalar_lea.smem [#allocation10], %s467
            %522 = sst [smem:[%s521]] %s518
            %s523 = sld [smem:[#allocation10 + %s467]]
            %s524 = scalar_lea.vmem [#allocation2], %s523
            %v525 = vld [vmem:[%s524] sm:$0x1]
            %vm526 = vcmp.eq.f32.partialorder %v525, %v486
            %v527 = vsel %vm526, %v417, 128
            %vm528 = vcmask 1040384
            %v529 = vsel %vm528, %v527, 2147483647
            %v530 = vand.u32 %v529, 65535
            %v531 = vshra.s32 %v529, 16
            %v532 = vcvt.s32.f32 %v530
            %v533 = vcvt.s32.f32 %v531
            %534 = vmin.xlane.f32.xlu0 %v533
            %v535 = vpop.xlane.xlu0 %534
            %vm536 = vcmp.eq.f32.partialorder %v533, %v535
            %v537 = vsel %vm536, %v532, inf
            %538 = vmin.xlane.f32.xlu0 %v537
            %v539 = vpop.xlane.xlu0 %538
            %v540 = vcvt.f32.s32 %v539
            %v541 = vcvt.f32.s32 %v535
            %v542 = vshll.u32 %v541, 16
            %v543 = vadd.s32 %v542, %v540
            %v544 = vrot.slane %v543, 4
            %vm545 = vcmp.lt.s32.totalorder %v543, %v544
            %v546 = vsel %vm545, %v543, %v544
            %v547 = vrot.slane %v546, 2
            %vm548 = vcmp.lt.s32.totalorder %v546, %v547
            %v549 = vsel %vm548, %v546, %v547
            %v550 = vrot.slane %v549, 1
            %vm551 = vcmp.lt.s32.totalorder %v549, %v550
            %v552 = vsel %vm551, %v549, %v550
            %s553 = vtos %v552
            %s554 = scalar_lea.smem [#allocation12], %s467
            %555 = sst [smem:[%s554]] %s553
            %v556 = vstv %s553
            %vm557 = vcmp.eq.s32.totalorder %v417, %v556
            %v558 = vsel %vm557, -1.0, %v525
            %559 = vst [vmem:[%s524] sm:$0x1] %v558
            %v560 = vsel %vm528, %v558, -inf
            %561 = vmax.xlane.f32.xlu0 %v560
            %v562 = vpop.xlane.xlu0 %561
            %s563 = scalar_lea.vmem [#allocation5], %s523
            %vm564 = vcmask 0
            %565 = vst.msk [vmem:[%s563] sm:$0x1] %vm564, %v562
          $region60: #{tpu_custom_call.1} parent=47 // loop_footer
            %s471 = sadd.s32 1, %s467
          $region61: #{tpu_custom_call.1} parent=47 // loop_footer_branch
            %466 = sbr.rel target = $region57
          $region62: #{tpu_custom_call.1} parent=47 // loop_exit
            _
        $region48: #{tpu_custom_call.1} parent=35 // pred_fallthru
          _
        // Predicated region
        $region63: #{tpu_custom_call.1} parent=35 // pred_check
          %p566 = pneg %p128
        $region64: #{tpu_custom_call.1} parent=35 // pred_check_branch
          %568 = sbr.rel (%p566) target = $region66
        $region65: #{tpu_custom_call.1} parent=35 // pred_region
          %s570 = ssub.s32 16, 16
          %571 = vsyncadd [#allocation8], %s570
          %574 = dma.smem_to_hbm [#allocation9], 16, %s4, [#allocation8]
        $region66: #{tpu_custom_call.1} parent=35 // pred_fallthru
          _
        // Predicated region
        $region67: #{tpu_custom_call.1} parent=35 // pred_check
          %p575 = pneg %p149
        $region68: #{tpu_custom_call.1} parent=35 // pred_check_branch
          %577 = sbr.rel (%p575) target = $region70
        $region69: #{tpu_custom_call.1} parent=35 // pred_region
          %s579 = ssub.s32 16, 16
          %580 = vsyncadd [#allocation11], %s579
          %583 = dma.smem_to_hbm [#allocation10], 16, %s5, [#allocation11]
        $region70: #{tpu_custom_call.1} parent=35 // pred_fallthru
          _
        // Predicated region
        $region71: #{tpu_custom_call.1} parent=35 // pred_check
          %p584 = pneg %p170
        $region72: #{tpu_custom_call.1} parent=35 // pred_check_branch
          %586 = sbr.rel (%p584) target = $region74
        $region73: #{tpu_custom_call.1} parent=35 // pred_region
          %s588 = ssub.s32 16, 16
          %589 = vsyncadd [#allocation11], %s588
          %592 = dma.smem_to_hbm [#allocation12], 16, %s6, [#allocation11]
        $region74: #{tpu_custom_call.1} parent=35 // pred_fallthru
          _
        // Predicated region
        $region75: #{tpu_custom_call.1} parent=35 // pred_check
          %p593 = pneg %p128
        $region76: #{tpu_custom_call.1} parent=35 // pred_check_branch
          %595 = sbr.rel (%p593) target = $region78
        $region77: #{tpu_custom_call.1} parent=35 // pred_region
          %596 = dma.done [#allocation8], 16
        $region78: #{tpu_custom_call.1} parent=35 // pred_fallthru
          _
        // Predicated region
        $region79: #{tpu_custom_call.1} parent=35 // pred_check
          %p597 = pneg %p149
        $region80: #{tpu_custom_call.1} parent=35 // pred_check_branch
          %599 = sbr.rel (%p597) target = $region82
        $region81: #{tpu_custom_call.1} parent=35 // pred_region
          %600 = dma.done [#allocation11], 16
        $region82: #{tpu_custom_call.1} parent=35 // pred_fallthru
          _
        // Predicated region
        $region83: #{tpu_custom_call.1} parent=35 // pred_check
          %p601 = pneg %p170
        $region84: #{tpu_custom_call.1} parent=35 // pred_check_branch
          %603 = sbr.rel (%p601) target = $region86
        $region85: #{tpu_custom_call.1} parent=35 // pred_region
          %604 = dma.done [#allocation11], 16
        $region86: #{tpu_custom_call.1} parent=35 // pred_fallthru
          _
        %605 = sfence
      $region36: #{tpu_custom_call.1} parent=5 // pred_fallthru
        _
      %p606 = scmp.le.s32.totalorder 2, %s16
      // Predicated region
      $region87: #{tpu_custom_call.1} parent=5 // pred_check
        %p607 = pneg %p606
      $region88: #{tpu_custom_call.1} parent=5 // pred_check_branch
        %609 = sbr.rel (%p607) target = $region90
      $region89: #{tpu_custom_call.1} parent=5 // pred_region
        %s610 = ssub.s32 %s16, 2
      $region90: #{tpu_custom_call.1} parent=5 // pred_fallthru
        _
    $region6: #{tpu_custom_call.1} parent=1 // loop_footer
      %s20 = sadd.s32 1, %s16
    $region7: #{tpu_custom_call.1} parent=1 // loop_footer_branch
      %15 = sbr.rel target = $region3
    $region8: #{tpu_custom_call.1} parent=1 // loop_exit
      _
    %611 = vsyncpa [#allocation7], 1
    %s612 = scalar_lea.sflag [#allocation7], 1
    %613 = vsyncpa %s612, 1
    %614 = vsyncpa [#allocation8], 1
    %s615 = scalar_lea.sflag [#allocation8], 1
    %616 = vsyncpa %s615, 1
    %617 = vsyncpa [#allocation11], 1

</llo_original>
